<compile_context>
chip_gen: v7x
topology: tpu7x:2x2x1
jax: 0.10.0
libtpu: 0.0.40
codegen_flags: <defaults>
</compile_context>

<pallas_src>
import numpy as np
import jax
import jax.numpy as jnp
from jax.experimental import pallas as pl
from jax.experimental.pallas import tpu as pltpu


def mask_linear_kernel(x_ref, w_ref, b_ref, out_ref):
    """Grid = (M/tm, N/tn, K/tk); K (reduction) axis last and 'arbitrary'."""
    k = pl.program_id(2)

    @pl.when(k == 0)
    def _():
        # Output tile is resident across the K axis (its block index is
        # k-invariant), so initialize it with the broadcast bias and then
        # accumulate straight on top — bias is added exactly once.
        out_ref[...] = jnp.broadcast_to(b_ref[...], out_ref.shape)

    # bf16 x bf16 -> f32 accumulate on the MXU, added into the resident tile.
    out_ref[...] += jnp.dot(x_ref[...], w_ref[...],
                            preferred_element_type=jnp.float32)


def mask_linear(x, weight, mask, bias=None, *, tm=256, tn=256, tk=512):
    """out = x @ (weight * mask) + bias, tiled for the TPU MXU.

    x:      [M, K] float32
    weight: [K, N] float32
    mask:   [K, N] float32 (typically 0/1)
    bias:   [N]    float32 or None
    """
    M, K = x.shape
    K2, N = weight.shape
    assert K == K2 and mask.shape == weight.shape
    if bias is None:
        bias = jnp.zeros((N,), jnp.float32)
    assert bias.shape == (N,)

    # Clamp tiles to the problem size (small-M case collapses the i axis to a
    # single tile so the masked weight is streamed from HBM exactly once).
    tm, tn, tk = min(tm, M), min(tn, N), min(tk, K)
    assert M % tm == 0 and N % tn == 0 and K % tk == 0, \
        "shapes must be multiples of the tile sizes (pad with zero K/N columns)"

    # Fuse the mask once in the wrapper (one XLA elementwise pass over K*N),
    # then feed bf16 operands to the MXU with f32 accumulation in-kernel.
    w_masked = (weight * mask).astype(jnp.bfloat16)
    x_bf16 = x.astype(jnp.bfloat16)
    b2d = bias.astype(jnp.float32).reshape(1, N)

    gi, gj, gk = M // tm, N // tn, K // tk

    cost = pl.CostEstimate(
        flops=2 * M * K * N,
        transcendentals=0,
        bytes_accessed=(2 * gj * M * K      # x (bf16), re-read per j tile
                        + 2 * gi * K * N    # masked weight (bf16), per i tile
                        + 4 * M * N         # f32 output
                        + 4 * N),           # bias
    )

    return pl.pallas_call(
        mask_linear_kernel,
        out_shape=jax.ShapeDtypeStruct((M, N), jnp.float32),
        grid_spec=pltpu.PrefetchScalarGridSpec(
            num_scalar_prefetch=0,
            grid=(gi, gj, gk),
            in_specs=[
                pl.BlockSpec((tm, tk), lambda i, j, k: (i, k)),   # x (bf16)
                pl.BlockSpec((tk, tn), lambda i, j, k: (k, j)),   # weight*mask (bf16)
                pl.BlockSpec((1, tn), lambda i, j, k: (0, j)),    # bias (f32)
            ],
            out_specs=pl.BlockSpec((tm, tn), lambda i, j, k: (i, j)),
        ),
        compiler_params=pltpu.CompilerParams(
            dimension_semantics=("parallel", "parallel", "arbitrary"),
            # 48 MiB: < v7x's 64 MiB physical per TC, comfortable on v5e/v6e,
            # and leaves headroom for double-buffered tiles at the defaults.
            vmem_limit_bytes=48 * 1024 * 1024,
        ),
        cost_estimate=cost,
    )(x_bf16, w_masked, b2d)


if __name__ == "__main__":
    # Small but TPU-friendly shapes: all dims (8,128)-aligned so lanes are
    # fully used and stores are unmasked.
    M = 256            # number of input rows
    in_features = 128
    out_features = 256

    key = jax.random.PRNGKey(0)
    k_x, k_w, k_b, k_m = jax.random.split(key, 4)

    # MaskLinear.reset_parameters: uniform(-stdv, stdv), stdv = 1/sqrt(out_features)
    stdv = 1.0 / np.sqrt(out_features)
    weight = jax.random.uniform(k_w, (in_features, out_features), jnp.float32,
                                -stdv, stdv)
    bias = jax.random.uniform(k_b, (out_features,), jnp.float32, -stdv, stdv)

    # A binary mask (typical usage) and a dense input.
    mask = (jax.random.uniform(k_m, (in_features, out_features)) > 0.5
            ).astype(jnp.float32)
    x = jax.random.normal(k_x, (M, in_features), jnp.float32)

    out = mask_linear(x, weight, mask, bias)
    jax.block_until_ready(out)

    # Cross-check against a plain-JAX f32 reference of the module's forward.
    # Tolerance accounts for the bf16 MXU inputs (f32 accumulation).
    ref = x @ (weight * mask) + bias
    np.testing.assert_allclose(np.array(out), np.array(ref),
                               rtol=2e-2, atol=2e-2)

    print("KERNEL_OK")
</pallas_src>

<mosaic_0001>
module attributes {stable_mosaic.version = 11 : i64} {
  func.func @mask_linear_kernel(%arg0: i32, %arg1: i32, %arg2: i32, %arg3: memref<256x128xbf16, #tpu.memory_space<vmem>>, %arg4: memref<128x256xbf16, #tpu.memory_space<vmem>>, %arg5: memref<1x256xf32, #tpu.memory_space<vmem>>, %arg6: memref<256x256xf32, #tpu.memory_space<vmem>>) attributes {dimension_semantics = [#tpu.dimension_semantics<parallel>, #tpu.dimension_semantics<parallel>, #tpu.dimension_semantics<arbitrary>], iteration_bounds = array<i64: 1, 1, 1>, scalar_prefetch = 0 : i64, scratch_operands = 0 : i64, tpu.core_type = #tpu.core_type<tc>, window_params = [{transform_indices = @transform_0, window_bounds = array<i64: 256, 128>}, {transform_indices = @transform_1, window_bounds = array<i64: 128, 256>}, {transform_indices = @transform_2, window_bounds = array<i64: 1, 256>}, {transform_indices = @transform_3, window_bounds = array<i64: 256, 256>}]} {
    %c0_i32 = arith.constant 0 : i32
    %0 = arith.cmpi eq, %arg2, %c0_i32 : i32
    %1 = arith.extui %0 : i1 to i32
    %c0_i32_0 = arith.constant 0 : i32
    %2 = arith.cmpi ne, %1, %c0_i32_0 : i32
    scf.if %2 {
      %c0_8 = arith.constant 0 : index
      %c0_9 = arith.constant 0 : index
      %9 = vector.load %arg5[%c0_8, %c0_9] : memref<1x256xf32, #tpu.memory_space<vmem>>, vector<1x256xf32>
      %10 = vector.shape_cast %9 : vector<1x256xf32> to vector<1x256xf32>
      %11 = vector.broadcast %10 : vector<1x256xf32> to vector<256x256xf32>
      %c0_10 = arith.constant 0 : index
      %c0_11 = arith.constant 0 : index
      %12 = vector.load %arg6[%c0_10, %c0_11] : memref<256x256xf32, #tpu.memory_space<vmem>>, vector<256x256xf32>
      tpu.vector_store %arg6[%c0_10, %c0_11], %11 {strides = array<i32>} : memref<256x256xf32, #tpu.memory_space<vmem>>, vector<256x256xf32>,
    } else {
    }
    %c0 = arith.constant 0 : index
    %c0_1 = arith.constant 0 : index
    %3 = vector.load %arg6[%c0, %c0_1] : memref<256x256xf32, #tpu.memory_space<vmem>>, vector<256x256xf32>
    %c0_2 = arith.constant 0 : index
    %c0_3 = arith.constant 0 : index
    %4 = vector.load %arg3[%c0_2, %c0_3] : memref<256x128xbf16, #tpu.memory_space<vmem>>, vector<256x128xbf16>
    %c0_4 = arith.constant 0 : index
    %c0_5 = arith.constant 0 : index
    %5 = vector.load %arg4[%c0_4, %c0_5] : memref<128x256xbf16, #tpu.memory_space<vmem>>, vector<128x256xbf16>
    %cst = arith.constant dense<0.000000e+00> : vector<256x256xf32>
    %6 = tpu.matmul %4, %5, %cst {dimension_numbers = #tpu.dot_dimension_numbers<[1], [0], [0], [1], [0, 0, 1, 1], [], []>} : vector<256x128xbf16>, vector<128x256xbf16>, vector<256x256xf32> -> vector<256x256xf32>
    %7 = arith.addf %3, %6 : vector<256x256xf32>
    %c0_6 = arith.constant 0 : index
    %c0_7 = arith.constant 0 : index
    %8 = vector.load %arg6[%c0_6, %c0_7] : memref<256x256xf32, #tpu.memory_space<vmem>>, vector<256x256xf32>
    tpu.vector_store %arg6[%c0_6, %c0_7], %7 {strides = array<i32>} : memref<256x256xf32, #tpu.memory_space<vmem>>, vector<256x256xf32>,
    return
  }
  func.func @transform_0(%arg0: i32, %arg1: i32, %arg2: i32) -> (i32, i32) {
    %c0_i32 = arith.constant 0 : i32
    return %arg0, %arg2 : i32, i32
  }
  func.func @transform_1(%arg0: i32, %arg1: i32, %arg2: i32) -> (i32, i32) {
    %c0_i32 = arith.constant 0 : i32
    return %arg2, %arg1 : i32, i32
  }
  func.func @transform_2(%arg0: i32, %arg1: i32, %arg2: i32) -> (i32, i32) {
    %c0_i32 = arith.constant 0 : i32
    %c0_i32_0 = arith.constant 0 : i32
    return %c0_i32, %arg1 : i32, i32
  }
  func.func @transform_3(%arg0: i32, %arg1: i32, %arg2: i32) -> (i32, i32) {
    %c0_i32 = arith.constant 0 : i32
    return %arg0, %arg1 : i32, i32
  }
}

</mosaic_0001>

<llo_original>
// kernel: tpu_custom_call.1
$region0: #{tpu_custom_call.1}
  #allocation0 [shape = 'u32[]', space=smem, size = 0x4, offset = 0x4, fixed_abs, tag = 'smem constant byte address 0x4 - core index']
  #allocation1 [shape = 'u32[144,128]{1,0:T(1,128)}', space=vmem, size = 0x12000, scoped, tag = 'internal scratch']
  %s0 = inlined_call_operand.hbm [shape: bf16[256,128], index: 0, kind: input, shape index: {}]
  %s1 = inlined_call_operand.hbm [shape: bf16[128,256], index: 1, kind: input, shape index: {}]
  %s2 = inlined_call_operand.vmem [shape: f32[1,256], index: 2, kind: input, shape index: {}]
  %s3 = inlined_call_operand.hbm [shape: f32[256,256], index: 3, kind: output, shape index: {}]
  %s4 = sld [smem:[#allocation0]]
  $region34: #{tpu_custom_call.1} parent=0
    _
  %s6 = ssub.s32 1, %s4
  %s7 = scalar_select 0, %s6, %s4
  $region1: #{tpu_custom_call.1} parent=0
    #allocation2 [shape = 'u8[65536]{0}', space=vmem, size = 0x10000, scoped, tag = 'input window, operand 0, single buffered']
    #allocation3 [shape = 's32[1]{0}', space=sflag, size = 0x4, scoped, tag = 'scoped memory for tpu_custom_call.1']
    #allocation4 [shape = 's32[1]{0}', space=sflag, size = 0x4, scoped, tag = 'scoped memory for tpu_custom_call.1']
    #allocation5 [shape = 'u8[65536]{0}', space=vmem, size = 0x10000, scoped, tag = 'input window, operand 1, single buffered']
    #allocation6 [shape = 's32[1]{0}', space=sflag, size = 0x4, scoped, tag = 'scoped memory for tpu_custom_call.1']
    #allocation7 [shape = 'u8[262144]{0}', space=vmem, size = 0x40000, scoped, tag = 'output window, operand 0, single buffered']
    %8 = vsyncpa [#allocation3], 0
    %9 = vsyncpa [#allocation6], 0
    %10 = vsyncpa [#allocation4], 0
    // Predicated region
    $region2: #{tpu_custom_call.1} parent=1 // pred_check
      _
    $region3: #{tpu_custom_call.1} parent=1 // pred_check_branch
      %12 = sbr.rel (0) target = $region5
    $region4: #{tpu_custom_call.1} parent=1 // pred_region
      %s14 = ssub.s32 2048, 2048
      %15 = vsyncadd [#allocation3], %s14
      %s16 = sshll.u32 [#allocation2], 4
      %s17 = int_to_ptr.vmem [resolvable:$true] %s16
      %22 = dma.hbm_to_vmem [thread:$0]  %s0, 2048, %s17, [#allocation3], 64, 64, 4
    $region5: #{tpu_custom_call.1} parent=1 // pred_fallthru
      _
    // Predicated region
    $region6: #{tpu_custom_call.1} parent=1 // pred_check
      _
    $region7: #{tpu_custom_call.1} parent=1 // pred_check_branch
      %24 = sbr.rel (0) target = $region9
    $region8: #{tpu_custom_call.1} parent=1 // pred_region
      %s26 = ssub.s32 2048, 2048
      %27 = vsyncadd [#allocation6], %s26
      %s28 = sshll.u32 [#allocation5], 4
      %s29 = int_to_ptr.vmem [resolvable:$true] %s28
      %34 = dma.hbm_to_vmem [thread:$0]  %s1, 2048, %s29, [#allocation6], 128, 128, 8
    $region9: #{tpu_custom_call.1} parent=1 // pred_fallthru
      _
    // Predicated region
    $region10: #{tpu_custom_call.1} parent=1 // pred_check
      _
    $region11: #{tpu_custom_call.1} parent=1 // pred_check_branch
      %36 = sbr.rel (0) target = $region13
    $region12: #{tpu_custom_call.1} parent=1 // pred_region
      _
    $region13: #{tpu_custom_call.1} parent=1 // pred_fallthru
      _
    // Predicated region
    $region14: #{tpu_custom_call.1} parent=1 // pred_check
      _
    $region15: #{tpu_custom_call.1} parent=1 // pred_check_branch
      %38 = sbr.rel (0) target = $region17
    $region16: #{tpu_custom_call.1} parent=1 // pred_region
      %39 = dma.done [#allocation3], 2048
    $region17: #{tpu_custom_call.1} parent=1 // pred_fallthru
      _
    // Predicated region
    $region18: #{tpu_custom_call.1} parent=1 // pred_check
      _
    $region19: #{tpu_custom_call.1} parent=1 // pred_check_branch
      %41 = sbr.rel (0) target = $region21
    $region20: #{tpu_custom_call.1} parent=1 // pred_region
      %42 = dma.done [#allocation6], 2048
    $region21: #{tpu_custom_call.1} parent=1 // pred_fallthru
      _
    %p44 = scmp.eq.s32.totalorder 0, 0
    // Predicated region
    $region22: #{tpu_custom_call.1} parent=1 // pred_check
      %p45 = pneg %p44
    $region23: #{tpu_custom_call.1} parent=1 // pred_check_branch
      %47 = sbr.rel (%p45) target = $region25
    $region24: #{tpu_custom_call.1} parent=1 // pred_region
      %v48 = vld [vmem:[%s2] sm:$0x3]
      %v50 = vlaneseq
      %v51 = vshrl.u32 %v50, 7
      %v52 = vsub.s32 0, %v51
      %v53 = vrot.slane %v48, %v52
      %v54 = vlaneseq
      %v55 = vshrl.u32 %v54, 7
      %v56 = vsub.s32 1, %v55
      %v57 = vrot.slane %v48, %v56
      %60 = vst [vmem:[#allocation7] sm:$0xff] %v53
      %61 = vst [vmem:[#allocation7 + $0x8] sm:$0xff] %v57
      %62 = vst [vmem:[#allocation7 + $0x10] sm:$0xff] %v53
      %63 = vst [vmem:[#allocation7 + $0x18] sm:$0xff] %v57
      %64 = vst [vmem:[#allocation7 + $0x20] sm:$0xff] %v53
      %65 = vst [vmem:[#allocation7 + $0x28] sm:$0xff] %v57
      %66 = vst [vmem:[#allocation7 + $0x30] sm:$0xff] %v53
      %67 = vst [vmem:[#allocation7 + $0x38] sm:$0xff] %v57
      %68 = vst [vmem:[#allocation7 + $0x40] sm:$0xff] %v53
      %69 = vst [vmem:[#allocation7 + $0x48] sm:$0xff] %v57
      %70 = vst [vmem:[#allocation7 + $0x50] sm:$0xff] %v53
      %71 = vst [vmem:[#allocation7 + $0x58] sm:$0xff] %v57
      %72 = vst [vmem:[#allocation7 + $0x60] sm:$0xff] %v53
      %73 = vst [vmem:[#allocation7 + $0x68] sm:$0xff] %v57
      %74 = vst [vmem:[#allocation7 + $0x70] sm:$0xff] %v53
      %75 = vst [vmem:[#allocation7 + $0x78] sm:$0xff] %v57
      %76 = vst [vmem:[#allocation7 + $0x80] sm:$0xff] %v53
      %77 = vst [vmem:[#allocation7 + $0x88] sm:$0xff] %v57
      %78 = vst [vmem:[#allocation7 + $0x90] sm:$0xff] %v53
      %79 = vst [vmem:[#allocation7 + $0x98] sm:$0xff] %v57
      %80 = vst [vmem:[#allocation7 + $0xa0] sm:$0xff] %v53
      %81 = vst [vmem:[#allocation7 + $0xa8] sm:$0xff] %v57
      %82 = vst [vmem:[#allocation7 + $0xb0] sm:$0xff] %v53
      %83 = vst [vmem:[#allocation7 + $0xb8] sm:$0xff] %v57
      %84 = vst [vmem:[#allocation7 + $0xc0] sm:$0xff] %v53
      %85 = vst [vmem:[#allocation7 + $0xc8] sm:$0xff] %v57
      %86 = vst [vmem:[#allocation7 + $0xd0] sm:$0xff] %v53
      %87 = vst [vmem:[#allocation7 + $0xd8] sm:$0xff] %v57
      %88 = vst [vmem:[#allocation7 + $0xe0] sm:$0xff] %v53
      %89 = vst [vmem:[#allocation7 + $0xe8] sm:$0xff] %v57
      %90 = vst [vmem:[#allocation7 + $0xf0] sm:$0xff] %v53
      %91 = vst [vmem:[#allocation7 + $0xf8] sm:$0xff] %v57
      %92 = vst [vmem:[#allocation7 + $0x100] sm:$0xff] %v53
      %93 = vst [vmem:[#allocation7 + $0x108] sm:$0xff] %v57
      %94 = vst [vmem:[#allocation7 + $0x110] sm:$0xff] %v53
      %95 = vst [vmem:[#allocation7 + $0x118] sm:$0xff] %v57
      %96 = vst [vmem:[#allocation7 + $0x120] sm:$0xff] %v53
      %97 = vst [vmem:[#allocation7 + $0x128] sm:$0xff] %v57
      %98 = vst [vmem:[#allocation7 + $0x130] sm:$0xff] %v53
      %99 = vst [vmem:[#allocation7 + $0x138] sm:$0xff] %v57
      %100 = vst [vmem:[#allocation7 + $0x140] sm:$0xff] %v53
      %101 = vst [vmem:[#allocation7 + $0x148] sm:$0xff] %v57
      %102 = vst [vmem:[#allocation7 + $0x150] sm:$0xff] %v53
      %103 = vst [vmem:[#allocation7 + $0x158] sm:$0xff] %v57
      %104 = vst [vmem:[#allocation7 + $0x160] sm:$0xff] %v53
      %105 = vst [vmem:[#allocation7 + $0x168] sm:$0xff] %v57
      %106 = vst [vmem:[#allocation7 + $0x170] sm:$0xff] %v53
      %107 = vst [vmem:[#allocation7 + $0x178] sm:$0xff] %v57
      %108 = vst [vmem:[#allocation7 + $0x180] sm:$0xff] %v53
      %109 = vst [vmem:[#allocation7 + $0x188] sm:$0xff] %v57
      %110 = vst [vmem:[#allocation7 + $0x190] sm:$0xff] %v53
      %111 = vst [vmem:[#allocation7 + $0x198] sm:$0xff] %v57
      %112 = vst [vmem:[#allocation7 + $0x1a0] sm:$0xff] %v53
      %113 = vst [vmem:[#allocation7 + $0x1a8] sm:$0xff] %v57
      %114 = vst [vmem:[#allocation7 + $0x1b0] sm:$0xff] %v53
      %115 = vst [vmem:[#allocation7 + $0x1b8] sm:$0xff] %v57
      %116 = vst [vmem:[#allocation7 + $0x1c0] sm:$0xff] %v53
      %117 = vst [vmem:[#allocation7 + $0x1c8] sm:$0xff] %v57
      %118 = vst [vmem:[#allocation7 + $0x1d0] sm:$0xff] %v53
      %119 = vst [vmem:[#allocation7 + $0x1d8] sm:$0xff] %v57
      %120 = vst [vmem:[#allocation7 + $0x1e0] sm:$0xff] %v53
      %121 = vst [vmem:[#allocation7 + $0x1e8] sm:$0xff] %v57
      %122 = vst [vmem:[#allocation7 + $0x1f0] sm:$0xff] %v53
      %123 = vst [vmem:[#allocation7 + $0x1f8] sm:$0xff] %v57
    $region25: #{tpu_custom_call.1} parent=1 // pred_fallthru
      _
    %v124 = vld [vmem:[#allocation7] sm:$0xff]
    %v125 = vld [vmem:[#allocation7 + $0x8] sm:$0xff]
    %v126 = vld [vmem:[#allocation7 + $0x10] sm:$0xff]
    %v127 = vld [vmem:[#allocation7 + $0x18] sm:$0xff]
    %v128 = vld [vmem:[#allocation7 + $0x20] sm:$0xff]
    %v129 = vld [vmem:[#allocation7 + $0x28] sm:$0xff]
    %v130 = vld [vmem:[#allocation7 + $0x30] sm:$0xff]
    %v131 = vld [vmem:[#allocation7 + $0x38] sm:$0xff]
    %v132 = vld [vmem:[#allocation7 + $0x40] sm:$0xff]
    %v133 = vld [vmem:[#allocation7 + $0x48] sm:$0xff]
    %v134 = vld [vmem:[#allocation7 + $0x50] sm:$0xff]
    %v135 = vld [vmem:[#allocation7 + $0x58] sm:$0xff]
    %v136 = vld [vmem:[#allocation7 + $0x60] sm:$0xff]
    %v137 = vld [vmem:[#allocation7 + $0x68] sm:$0xff]
    %v138 = vld [vmem:[#allocation7 + $0x70] sm:$0xff]
    %v139 = vld [vmem:[#allocation7 + $0x78] sm:$0xff]
    %v140 = vld [vmem:[#allocation7 + $0x80] sm:$0xff]
    %v141 = vld [vmem:[#allocation7 + $0x88] sm:$0xff]
    %v142 = vld [vmem:[#allocation7 + $0x90] sm:$0xff]
    %v143 = vld [vmem:[#allocation7 + $0x98] sm:$0xff]
    %v144 = vld [vmem:[#allocation7 + $0xa0] sm:$0xff]
    %v145 = vld [vmem:[#allocation7 + $0xa8] sm:$0xff]
    %v146 = vld [vmem:[#allocation7 + $0xb0] sm:$0xff]
    %v147 = vld [vmem:[#allocation7 + $0xb8] sm:$0xff]
    %v148 = vld [vmem:[#allocation7 + $0xc0] sm:$0xff]
    %v149 = vld [vmem:[#allocation7 + $0xc8] sm:$0xff]
    %v150 = vld [vmem:[#allocation7 + $0xd0] sm:$0xff]
    %v151 = vld [vmem:[#allocation7 + $0xd8] sm:$0xff]
    %v152 = vld [vmem:[#allocation7 + $0xe0] sm:$0xff]
    %v153 = vld [vmem:[#allocation7 + $0xe8] sm:$0xff]
    %v154 = vld [vmem:[#allocation7 + $0xf0] sm:$0xff]
    %v155 = vld [vmem:[#allocation7 + $0xf8] sm:$0xff]
    %v156 = vld [vmem:[#allocation7 + $0x100] sm:$0xff]
    %v157 = vld [vmem:[#allocation7 + $0x108] sm:$0xff]
    %v158 = vld [vmem:[#allocation7 + $0x110] sm:$0xff]
    %v159 = vld [vmem:[#allocation7 + $0x118] sm:$0xff]
    %v160 = vld [vmem:[#allocation7 + $0x120] sm:$0xff]
    %v161 = vld [vmem:[#allocation7 + $0x128] sm:$0xff]
    %v162 = vld [vmem:[#allocation7 + $0x130] sm:$0xff]
    %v163 = vld [vmem:[#allocation7 + $0x138] sm:$0xff]
    %v164 = vld [vmem:[#allocation7 + $0x140] sm:$0xff]
    %v165 = vld [vmem:[#allocation7 + $0x148] sm:$0xff]
    %v166 = vld [vmem:[#allocation7 + $0x150] sm:$0xff]
    %v167 = vld [vmem:[#allocation7 + $0x158] sm:$0xff]
    %v168 = vld [vmem:[#allocation7 + $0x160] sm:$0xff]
    %v169 = vld [vmem:[#allocation7 + $0x168] sm:$0xff]
    %v170 = vld [vmem:[#allocation7 + $0x170] sm:$0xff]
    %v171 = vld [vmem:[#allocation7 + $0x178] sm:$0xff]
    %v172 = vld [vmem:[#allocation7 + $0x180] sm:$0xff]
    %v173 = vld [vmem:[#allocation7 + $0x188] sm:$0xff]
    %v174 = vld [vmem:[#allocation7 + $0x190] sm:$0xff]
    %v175 = vld [vmem:[#allocation7 + $0x198] sm:$0xff]
    %v176 = vld [vmem:[#allocation7 + $0x1a0] sm:$0xff]
    %v177 = vld [vmem:[#allocation7 + $0x1a8] sm:$0xff]
    %v178 = vld [vmem:[#allocation7 + $0x1b0] sm:$0xff]
    %v179 = vld [vmem:[#allocation7 + $0x1b8] sm:$0xff]
    %v180 = vld [vmem:[#allocation7 + $0x1c0] sm:$0xff]
    %v181 = vld [vmem:[#allocation7 + $0x1c8] sm:$0xff]
    %v182 = vld [vmem:[#allocation7 + $0x1d0] sm:$0xff]
    %v183 = vld [vmem:[#allocation7 + $0x1d8] sm:$0xff]
    %v184 = vld [vmem:[#allocation7 + $0x1e0] sm:$0xff]
    %v185 = vld [vmem:[#allocation7 + $0x1e8] sm:$0xff]
    %v186 = vld [vmem:[#allocation7 + $0x1f0] sm:$0xff]
    %v187 = vld [vmem:[#allocation7 + $0x1f8] sm:$0xff]
    %v188 = vld [vmem:[#allocation2] sm:$0xf]
    %v189 = vld [vmem:[#allocation2 + $0x4] sm:$0xf]
    %v190 = vld [vmem:[#allocation2 + $0x8] sm:$0xf]
    %v191 = vld [vmem:[#allocation2 + $0xc] sm:$0xf]
    %v192 = vld [vmem:[#allocation2 + $0x10] sm:$0xf]
    %v193 = vld [vmem:[#allocation2 + $0x14] sm:$0xf]
    %v194 = vld [vmem:[#allocation2 + $0x18] sm:$0xf]
    %v195 = vld [vmem:[#allocation2 + $0x1c] sm:$0xf]
    %v196 = vld [vmem:[#allocation2 + $0x20] sm:$0xf]
    %v197 = vld [vmem:[#allocation2 + $0x24] sm:$0xf]
    %v198 = vld [vmem:[#allocation2 + $0x28] sm:$0xf]
    %v199 = vld [vmem:[#allocation2 + $0x2c] sm:$0xf]
    %v200 = vld [vmem:[#allocation2 + $0x30] sm:$0xf]
    %v201 = vld [vmem:[#allocation2 + $0x34] sm:$0xf]
    %v202 = vld [vmem:[#allocation2 + $0x38] sm:$0xf]
    %v203 = vld [vmem:[#allocation2 + $0x3c] sm:$0xf]
    %v204 = vld [vmem:[#allocation2 + $0x40] sm:$0xf]
    %v205 = vld [vmem:[#allocation2 + $0x44] sm:$0xf]
    %v206 = vld [vmem:[#allocation2 + $0x48] sm:$0xf]
    %v207 = vld [vmem:[#allocation2 + $0x4c] sm:$0xf]
    %v208 = vld [vmem:[#allocation2 + $0x50] sm:$0xf]
    %v209 = vld [vmem:[#allocation2 + $0x54] sm:$0xf]
    %v210 = vld [vmem:[#allocation2 + $0x58] sm:$0xf]
    %v211 = vld [vmem:[#allocation2 + $0x5c] sm:$0xf]
    %v212 = vld [vmem:[#allocation2 + $0x60] sm:$0xf]
    %v213 = vld [vmem:[#allocation2 + $0x64] sm:$0xf]
    %v214 = vld [vmem:[#allocation2 + $0x68] sm:$0xf]
    %v215 = vld [vmem:[#allocation2 + $0x6c] sm:$0xf]
    %v216 = vld [vmem:[#allocation2 + $0x70] sm:$0xf]
    %v217 = vld [vmem:[#allocation2 + $0x74] sm:$0xf]
    %v218 = vld [vmem:[#allocation2 + $0x78] sm:$0xf]
    %v219 = vld [vmem:[#allocation2 + $0x7c] sm:$0xf]
    %v220 = vld [vmem:[#allocation5] sm:$0xff]
    %v221 = vld [vmem:[#allocation5 + $0x8] sm:$0xff]
    %v222 = vld [vmem:[#allocation5 + $0x10] sm:$0xff]
    %v223 = vld [vmem:[#allocation5 + $0x18] sm:$0xff]
    %v224 = vld [vmem:[#allocation5 + $0x20] sm:$0xff]
    %v225 = vld [vmem:[#allocation5 + $0x28] sm:$0xff]
    %v226 = vld [vmem:[#allocation5 + $0x30] sm:$0xff]
    %v227 = vld [vmem:[#allocation5 + $0x38] sm:$0xff]
    %v228 = vld [vmem:[#allocation5 + $0x40] sm:$0xff]
    %v229 = vld [vmem:[#allocation5 + $0x48] sm:$0xff]
    %v230 = vld [vmem:[#allocation5 + $0x50] sm:$0xff]
    %v231 = vld [vmem:[#allocation5 + $0x58] sm:$0xff]
    %v232 = vld [vmem:[#allocation5 + $0x60] sm:$0xff]
    %v233 = vld [vmem:[#allocation5 + $0x68] sm:$0xff]
    %v234 = vld [vmem:[#allocation5 + $0x70] sm:$0xff]
    %v235 = vld [vmem:[#allocation5 + $0x78] sm:$0xff]
    %v268 = vunpack.c.l.b16 %v188
    %v269 = vunpack.c.l.b16 %v189
    %v270 = vunpack.c.l.b16 %v190
    %v271 = vunpack.c.l.b16 %v191
    %v272 = vunpack.c.l.b16 %v192
    %v273 = vunpack.c.l.b16 %v193
    %v274 = vunpack.c.l.b16 %v194
    %v275 = vunpack.c.l.b16 %v195
    %v276 = vunpack.c.l.b16 %v196
    %v277 = vunpack.c.l.b16 %v197
    %v278 = vunpack.c.l.b16 %v198
    %v279 = vunpack.c.l.b16 %v199
    %v280 = vunpack.c.l.b16 %v200
    %v281 = vunpack.c.l.b16 %v201
    %v282 = vunpack.c.l.b16 %v202
    %v283 = vunpack.c.l.b16 %v203
    %v284 = vunpack.c.l.b16 %v204
    %v285 = vunpack.c.l.b16 %v205
    %v286 = vunpack.c.l.b16 %v206
    %v287 = vunpack.c.l.b16 %v207
    %v288 = vunpack.c.l.b16 %v208
    %v289 = vunpack.c.l.b16 %v209
    %v290 = vunpack.c.l.b16 %v210
    %v291 = vunpack.c.l.b16 %v211
    %v292 = vunpack.c.l.b16 %v212
    %v293 = vunpack.c.l.b16 %v213
    %v294 = vunpack.c.l.b16 %v214
    %v295 = vunpack.c.l.b16 %v215
    %v296 = vunpack.c.l.b16 %v216
    %v297 = vunpack.c.l.b16 %v217
    %v298 = vunpack.c.l.b16 %v218
    %v299 = vunpack.c.l.b16 %v219
    %v300 = vpack.c.b16 %v269, %v268
    %v301 = vpack.c.b16 %v271, %v270
    %v302 = vpack.c.b16 %v273, %v272
    %v303 = vpack.c.b16 %v275, %v274
    %v304 = vpack.c.b16 %v277, %v276
    %v305 = vpack.c.b16 %v279, %v278
    %v306 = vpack.c.b16 %v281, %v280
    %v307 = vpack.c.b16 %v283, %v282
    %v308 = vpack.c.b16 %v285, %v284
    %v309 = vpack.c.b16 %v287, %v286
    %v310 = vpack.c.b16 %v289, %v288
    %v311 = vpack.c.b16 %v291, %v290
    %v312 = vpack.c.b16 %v293, %v292
    %v313 = vpack.c.b16 %v295, %v294
    %v314 = vpack.c.b16 %v297, %v296
    %v315 = vpack.c.b16 %v299, %v298
    %v348 = vunpack.c.l.b16 %v220
    %v349 = vunpack.c.h.b16 %v220
    %v350 = vunpack.c.l.b16 %v221
    %v351 = vunpack.c.h.b16 %v221
    %v352 = vunpack.c.l.b16 %v222
    %v353 = vunpack.c.h.b16 %v222
    %v354 = vunpack.c.l.b16 %v223
    %v355 = vunpack.c.h.b16 %v223
    %v356 = vunpack.c.l.b16 %v224
    %v357 = vunpack.c.h.b16 %v224
    %v358 = vunpack.c.l.b16 %v225
    %v359 = vunpack.c.h.b16 %v225
    %v360 = vunpack.c.l.b16 %v226
    %v361 = vunpack.c.h.b16 %v226
    %v362 = vunpack.c.l.b16 %v227
    %v363 = vunpack.c.h.b16 %v227
    %v364 = vunpack.c.l.b16 %v228
    %v365 = vunpack.c.h.b16 %v228
    %v366 = vunpack.c.l.b16 %v229
    %v367 = vunpack.c.h.b16 %v229
    %v368 = vunpack.c.l.b16 %v230
    %v369 = vunpack.c.h.b16 %v230
    %v370 = vunpack.c.l.b16 %v231
    %v371 = vunpack.c.h.b16 %v231
    %v372 = vunpack.c.l.b16 %v232
    %v373 = vunpack.c.h.b16 %v232
    %v374 = vunpack.c.l.b16 %v233
    %v375 = vunpack.c.h.b16 %v233
    %v376 = vunpack.c.l.b16 %v234
    %v377 = vunpack.c.h.b16 %v234
    %v378 = vunpack.c.l.b16 %v235
    %v379 = vunpack.c.h.b16 %v235
    %v380 = vpack.c.b16 %v350, %v348
    %v381 = vpack.c.b16 %v351, %v349
    %v382 = vpack.c.b16 %v354, %v352
    %v383 = vpack.c.b16 %v355, %v353
    %v384 = vpack.c.b16 %v358, %v356
    %v385 = vpack.c.b16 %v359, %v357
    %v386 = vpack.c.b16 %v362, %v360
    %v387 = vpack.c.b16 %v363, %v361
    %v388 = vpack.c.b16 %v366, %v364
    %v389 = vpack.c.b16 %v367, %v365
    %v390 = vpack.c.b16 %v370, %v368
    %v391 = vpack.c.b16 %v371, %v369
    %v392 = vpack.c.b16 %v374, %v372
    %v393 = vpack.c.b16 %v375, %v373
    %v394 = vpack.c.b16 %v378, %v376
    %v395 = vpack.c.b16 %v379, %v377
    %412 = vmatprep.subr.bf16.mxu0 %v381
    %413 = vmatpush1.bf16.msra.mxu0 %v380
    %414 = vmatprep.subr.bf16.mxu0 %v383
    %415 = vmatpush1.bf16.msra.mxu0 %v382
    %416 = vmatprep.subr.bf16.mxu0 %v385
    %417 = vmatpush1.bf16.msra.mxu0 %v384
    %418 = vmatprep.subr.bf16.mxu0 %v387
    %419 = vmatpush1.bf16.msra.mxu0 %v386
    %420 = vmatprep.subr.bf16.mxu0 %v389
    %421 = vmatpush1.bf16.msra.mxu0 %v388
    %422 = vmatprep.subr.bf16.mxu0 %v391
    %423 = vmatpush1.bf16.msra.mxu0 %v390
    %424 = vmatprep.subr.bf16.mxu0 %v393
    %425 = vmatpush1.bf16.msra.mxu0 %v392
    %426 = vmatprep.subr.bf16.mxu0 %v395
    %427 = vmatpush1.bf16.msra.mxu0 %v394
    %428 = vmatprep.subr.bf16.mxu0 0
    %429 = vmatpush1.bf16.msra.mxu0 0
    %430 = vmatprep.subr.bf16.mxu0 0
    %431 = vmatpush1.bf16.msra.mxu0 0
    %432 = vmatprep.subr.bf16.mxu0 0
    %433 = vmatpush1.bf16.msra.mxu0 0
    %434 = vmatprep.subr.bf16.mxu0 0
    %435 = vmatpush1.bf16.msra.mxu0 0
    %436 = vmatprep.subr.bf16.mxu0 0
    %437 = vmatpush1.bf16.msra.mxu0 0
    %438 = vmatprep.subr.bf16.mxu0 0
    %439 = vmatpush1.bf16.msra.mxu0 0
    %440 = vmatprep.subr.bf16.mxu0 0
    %441 = vmatpush1.bf16.msra.mxu0 0
    %442 = vmatprep.subr.bf16.mxu0 0
    %443 = vmatpush1.bf16.msra.mxu0 0
    %444 = vmatprep.mubr.bf16.mxu0 0
    %445 = vmatmul.mubr.bf16.gmra.mrb[0].mxu0 %v300
    %v446 = vpop.f32.mrb[0].mxu0
    %v447 = vadd.f32 0.0, %v446
    %v448 = vpop.f32.mrb[0].mxu0
    %v449 = vadd.f32 0.0, %v448
    %v450 = vpop.f32.mrb[0].mxu0
    %v451 = vadd.f32 0.0, %v450
    %v452 = vpop.f32.mrb[0].mxu0
    %v453 = vadd.f32 0.0, %v452
    %454 = vmatprep.mubr.bf16.mxu0 0
    %455 = vmatmul.mubr.bf16.gmra.mrb[0].mxu0 %v301
    %v456 = vpop.f32.mrb[0].mxu0
    %v457 = vadd.f32 0.0, %v456
    %v458 = vpop.f32.mrb[0].mxu0
    %v459 = vadd.f32 0.0, %v458
    %v460 = vpop.f32.mrb[0].mxu0
    %v461 = vadd.f32 0.0, %v460
    %v462 = vpop.f32.mrb[0].mxu0
    %v463 = vadd.f32 0.0, %v462
    %464 = vmatprep.mubr.bf16.mxu0 0
    %465 = vmatmul.mubr.bf16.gmra.mrb[0].mxu0 %v302
    %v466 = vpop.f32.mrb[0].mxu0
    %v467 = vadd.f32 0.0, %v466
    %v468 = vpop.f32.mrb[0].mxu0
    %v469 = vadd.f32 0.0, %v468
    %v470 = vpop.f32.mrb[0].mxu0
    %v471 = vadd.f32 0.0, %v470
    %v472 = vpop.f32.mrb[0].mxu0
    %v473 = vadd.f32 0.0, %v472
    %474 = vmatprep.mubr.bf16.mxu0 0
    %475 = vmatmul.mubr.bf16.gmra.mrb[0].mxu0 %v303
    %v476 = vpop.f32.mrb[0].mxu0
    %v477 = vadd.f32 0.0, %v476
    %v478 = vpop.f32.mrb[0].mxu0
    %v479 = vadd.f32 0.0, %v478
    %v480 = vpop.f32.mrb[0].mxu0
    %v481 = vadd.f32 0.0, %v480
    %v482 = vpop.f32.mrb[0].mxu0
    %v483 = vadd.f32 0.0, %v482
    %484 = vmatprep.mubr.bf16.mxu0 0
    %485 = vmatmul.mubr.bf16.gmra.mrb[0].mxu0 %v304
    %v486 = vpop.f32.mrb[0].mxu0
    %v487 = vadd.f32 0.0, %v486
    %v488 = vpop.f32.mrb[0].mxu0
    %v489 = vadd.f32 0.0, %v488
    %v490 = vpop.f32.mrb[0].mxu0
    %v491 = vadd.f32 0.0, %v490
    %v492 = vpop.f32.mrb[0].mxu0
    %v493 = vadd.f32 0.0, %v492
    %494 = vmatprep.mubr.bf16.mxu0 0
    %495 = vmatmul.mubr.bf16.gmra.mrb[0].mxu0 %v305
    %v496 = vpop.f32.mrb[0].mxu0
    %v497 = vadd.f32 0.0, %v496
    %v498 = vpop.f32.mrb[0].mxu0
    %v499 = vadd.f32 0.0, %v498
    %v500 = vpop.f32.mrb[0].mxu0
    %v501 = vadd.f32 0.0, %v500
    %v502 = vpop.f32.mrb[0].mxu0
    %v503 = vadd.f32 0.0, %v502
    %504 = vmatprep.mubr.bf16.mxu0 0
    %505 = vmatmul.mubr.bf16.gmra.mrb[0].mxu0 %v306
    %v506 = vpop.f32.mrb[0].mxu0
    %v507 = vadd.f32 0.0, %v506
    %v508 = vpop.f32.mrb[0].mxu0
    %v509 = vadd.f32 0.0, %v508
    %v510 = vpop.f32.mrb[0].mxu0
    %v511 = vadd.f32 0.0, %v510
    %v512 = vpop.f32.mrb[0].mxu0
    %v513 = vadd.f32 0.0, %v512
    %514 = vmatprep.mubr.bf16.mxu0 0
    %515 = vmatmul.mubr.bf16.gmra.mrb[0].mxu0 %v307
    %v516 = vpop.f32.mrb[0].mxu0
    %v517 = vadd.f32 0.0, %v516
    %v518 = vpop.f32.mrb[0].mxu0
    %v519 = vadd.f32 0.0, %v518
    %v520 = vpop.f32.mrb[0].mxu0
    %v521 = vadd.f32 0.0, %v520
    %v522 = vpop.f32.mrb[0].mxu0
    %v523 = vadd.f32 0.0, %v522
    %524 = vmatprep.mubr.bf16.mxu0 0
    %525 = vmatmul.mubr.bf16.gmra.mrb[0].mxu0 %v308
    %v526 = vpop.f32.mrb[0].mxu0
    %v527 = vadd.f32 0.0, %v526
    %v528 = vpop.f32.mrb[0].mxu0
    %v529 = vadd.f32 0.0, %v528
    %v530 = vpop.f32.mrb[0].mxu0
    %v531 = vadd.f32 0.0, %v530
    %v532 = vpop.f32.mrb[0].mxu0
    %v533 = vadd.f32 0.0, %v532
    %534 = vmatprep.mubr.bf16.mxu0 0
    %535 = vmatmul.mubr.bf16.gmra.mrb[0].mxu0 %v309
    %v536 = vpop.f32.mrb[0].mxu0
    %v537 = vadd.f32 0.0, %v536
    %v538 = vpop.f32.mrb[0].mxu0
    %v539 = vadd.f32 0.0, %v538
    %v540 = vpop.f32.mrb[0].mxu0
    %v541 = vadd.f32 0.0, %v540
    %v542 = vpop.f32.mrb[0].mxu0
    %v543 = vadd.f32 0.0, %v542
    %544 = vmatprep.mubr.bf16.mxu0 0
    %545 = vmatmul.mubr.bf16.gmra.mrb[0].mxu0 %v310
    %v546 = vpop.f32.mrb[0].mxu0
    %v547 = vadd.f32 0.0, %v546
    %v548 = vpop.f32.mrb[0].mxu0
    %v549 = vadd.f32 0.0, %v548
    %v550 = vpop.f32.mrb[0].mxu0
    %v551 = vadd.f32 0.0, %v550
    %v552 = vpop.f32.mrb[0].mxu0
    %v553 = vadd.f32 0.0, %v552
    %554 = vmatprep.mubr.bf16.mxu0 0
    %555 = vmatmul.mubr.bf16.gmra.mrb[0].mxu0 %v311
    %v556 = vpop.f32.mrb[0].mxu0
    %v557 = vadd.f32 0.0, %v556
    %v558 = vpop.f32.mrb[0].mxu0
    %v559 = vadd.f32 0.0, %v558
    %v560 = vpop.f32.mrb[0].mxu0
    %v561 = vadd.f32 0.0, %v560
    %v562 = vpop.f32.mrb[0].mxu0
    %v563 = vadd.f32 0.0, %v562
    %564 = vmatprep.mubr.bf16.mxu0 0
    %565 = vmatmul.mubr.bf16.gmra.mrb[0].mxu0 %v312
    %v566 = vpop.f32.mrb[0].mxu0
    %v567 = vadd.f32 0.0, %v566
    %v568 = vpop.f32.mrb[0].mxu0
    %v569 = vadd.f32 0.0, %v568
    %v570 = vpop.f32.mrb[0].mxu0
    %v571 = vadd.f32 0.0, %v570
    %v572 = vpop.f32.mrb[0].mxu0
    %v573 = vadd.f32 0.0, %v572
    %574 = vmatprep.mubr.bf16.mxu0 0
    %575 = vmatmul.mubr.bf16.gmra.mrb[0].mxu0 %v313
    %v576 = vpop.f32.mrb[0].mxu0
    %v577 = vadd.f32 0.0, %v576
    %v578 = vpop.f32.mrb[0].mxu0
    %v579 = vadd.f32 0.0, %v578
    %v580 = vpop.f32.mrb[0].mxu0
    %v581 = vadd.f32 0.0, %v580
    %v582 = vpop.f32.mrb[0].mxu0
    %v583 = vadd.f32 0.0, %v582
    %584 = vmatprep.mubr.bf16.mxu0 0
    %585 = vmatmul.mubr.bf16.gmra.mrb[0].mxu0 %v314
    %v586 = vpop.f32.mrb[0].mxu0
    %v587 = vadd.f32 0.0, %v586
    %v588 = vpop.f32.mrb[0].mxu0
    %v589 = vadd.f32 0.0, %v588
    %v590 = vpop.f32.mrb[0].mxu0
    %v591 = vadd.f32 0.0, %v590
    %v592 = vpop.f32.mrb[0].mxu0
    %v593 = vadd.f32 0.0, %v592
    %594 = vmatprep.mubr.bf16.mxu0 0
    %595 = vmatmul.mubr.bf16.gmra.mrb[0].mxu0 %v315
    %v596 = vpop.f32.mrb[0].mxu0
    %v597 = vadd.f32 0.0, %v596
    %v598 = vpop.f32.mrb[0].mxu0
    %v599 = vadd.f32 0.0, %v598
    %v600 = vpop.f32.mrb[0].mxu0
    %v601 = vadd.f32 0.0, %v600
    %v602 = vpop.f32.mrb[0].mxu0
    %v603 = vadd.f32 0.0, %v602
    %604 = vdwg.mxu0
    %v605 = vadd.f32 %v124, %v447
    %v606 = vadd.f32 %v125, %v449
    %v607 = vadd.f32 %v126, %v451
    %v608 = vadd.f32 %v127, %v453
    %v609 = vadd.f32 %v128, %v457
    %v610 = vadd.f32 %v129, %v459
    %v611 = vadd.f32 %v130, %v461
    %v612 = vadd.f32 %v131, %v463
    %v613 = vadd.f32 %v132, %v467
    %v614 = vadd.f32 %v133, %v469
    %v615 = vadd.f32 %v134, %v471
    %v616 = vadd.f32 %v135, %v473
    %v617 = vadd.f32 %v136, %v477
    %v618 = vadd.f32 %v137, %v479
    %v619 = vadd.f32 %v138, %v481
    %v620 = vadd.f32 %v139, %v483
    %v621 = vadd.f32 %v140, %v487
    %v622 = vadd.f32 %v141, %v489
    %v623 = vadd.f32 %v142, %v491
    %v624 = vadd.f32 %v143, %v493
    %v625 = vadd.f32 %v144, %v497
    %v626 = vadd.f32 %v145, %v499
    %v627 = vadd.f32 %v146, %v501
    %v628 = vadd.f32 %v147, %v503
    %v629 = vadd.f32 %v148, %v507
    %v630 = vadd.f32 %v149, %v509
    %v631 = vadd.f32 %v150, %v511
    %v632 = vadd.f32 %v151, %v513
    %v633 = vadd.f32 %v152, %v517
    %v634 = vadd.f32 %v153, %v519
    %v635 = vadd.f32 %v154, %v521
    %v636 = vadd.f32 %v155, %v523
    %v637 = vadd.f32 %v156, %v527
    %v638 = vadd.f32 %v157, %v529
    %v639 = vadd.f32 %v158, %v531
    %v640 = vadd.f32 %v159, %v533
    %v641 = vadd.f32 %v160, %v537
    %v642 = vadd.f32 %v161, %v539
    %v643 = vadd.f32 %v162, %v541
    %v644 = vadd.f32 %v163, %v543
    %v645 = vadd.f32 %v164, %v547
    %v646 = vadd.f32 %v165, %v549
    %v647 = vadd.f32 %v166, %v551
    %v648 = vadd.f32 %v167, %v553
    %v649 = vadd.f32 %v168, %v557
    %v650 = vadd.f32 %v169, %v559
    %v651 = vadd.f32 %v170, %v561
    %v652 = vadd.f32 %v171, %v563
    %v653 = vadd.f32 %v172, %v567
    %v654 = vadd.f32 %v173, %v569
    %v655 = vadd.f32 %v174, %v571
    %v656 = vadd.f32 %v175, %v573
    %v657 = vadd.f32 %v176, %v577
    %v658 = vadd.f32 %v177, %v579
    %v659 = vadd.f32 %v178, %v581
    %v660 = vadd.f32 %v179, %v583
    %v661 = vadd.f32 %v180, %v587
    %v662 = vadd.f32 %v181, %v589
    %v663 = vadd.f32 %v182, %v591
    %v664 = vadd.f32 %v183, %v593
    %v665 = vadd.f32 %v184, %v597
    %v666 = vadd.f32 %v185, %v599
    %v667 = vadd.f32 %v186, %v601
    %v668 = vadd.f32 %v187, %v603
    %669 = vst [vmem:[#allocation7] sm:$0xff] %v605
    %670 = vst [vmem:[#allocation7 + $0x8] sm:$0xff] %v606
    %671 = vst [vmem:[#allocation7 + $0x10] sm:$0xff] %v607
    %672 = vst [vmem:[#allocation7 + $0x18] sm:$0xff] %v608
    %673 = vst [vmem:[#allocation7 + $0x20] sm:$0xff] %v609
    %674 = vst [vmem:[#allocation7 + $0x28] sm:$0xff] %v610
    %675 = vst [vmem:[#allocation7 + $0x30] sm:$0xff] %v611
    %676 = vst [vmem:[#allocation7 + $0x38] sm:$0xff] %v612
    %677 = vst [vmem:[#allocation7 + $0x40] sm:$0xff] %v613
    %678 = vst [vmem:[#allocation7 + $0x48] sm:$0xff] %v614
    %679 = vst [vmem:[#allocation7 + $0x50] sm:$0xff] %v615
    %680 = vst [vmem:[#allocation7 + $0x58] sm:$0xff] %v616
    %681 = vst [vmem:[#allocation7 + $0x60] sm:$0xff] %v617
    %682 = vst [vmem:[#allocation7 + $0x68] sm:$0xff] %v618
    %683 = vst [vmem:[#allocation7 + $0x70] sm:$0xff] %v619
    %684 = vst [vmem:[#allocation7 + $0x78] sm:$0xff] %v620
    %685 = vst [vmem:[#allocation7 + $0x80] sm:$0xff] %v621
    %686 = vst [vmem:[#allocation7 + $0x88] sm:$0xff] %v622
    %687 = vst [vmem:[#allocation7 + $0x90] sm:$0xff] %v623
    %688 = vst [vmem:[#allocation7 + $0x98] sm:$0xff] %v624
    %689 = vst [vmem:[#allocation7 + $0xa0] sm:$0xff] %v625
    %690 = vst [vmem:[#allocation7 + $0xa8] sm:$0xff] %v626
    %691 = vst [vmem:[#allocation7 + $0xb0] sm:$0xff] %v627
    %692 = vst [vmem:[#allocation7 + $0xb8] sm:$0xff] %v628
    %693 = vst [vmem:[#allocation7 + $0xc0] sm:$0xff] %v629
    %694 = vst [vmem:[#allocation7 + $0xc8] sm:$0xff] %v630
    %695 = vst [vmem:[#allocation7 + $0xd0] sm:$0xff] %v631
    %696 = vst [vmem:[#allocation7 + $0xd8] sm:$0xff] %v632
    %697 = vst [vmem:[#allocation7 + $0xe0] sm:$0xff] %v633
    %698 = vst [vmem:[#allocation7 + $0xe8] sm:$0xff] %v634
    %699 = vst [vmem:[#allocation7 + $0xf0] sm:$0xff] %v635
    %700 = vst [vmem:[#allocation7 + $0xf8] sm:$0xff] %v636
    %701 = vst [vmem:[#allocation7 + $0x100] sm:$0xff] %v637
    %702 = vst [vmem:[#allocation7 + $0x108] sm:$0xff] %v638
    %703 = vst [vmem:[#allocation7 + $0x110] sm:$0xff] %v639
    %704 = vst [vmem:[#allocation7 + $0x118] sm:$0xff] %v640
    %705 = vst [vmem:[#allocation7 + $0x120] sm:$0xff] %v641
    %706 = vst [vmem:[#allocation7 + $0x128] sm:$0xff] %v642
    %707 = vst [vmem:[#allocation7 + $0x130] sm:$0xff] %v643
    %708 = vst [vmem:[#allocation7 + $0x138] sm:$0xff] %v644
    %709 = vst [vmem:[#allocation7 + $0x140] sm:$0xff] %v645
    %710 = vst [vmem:[#allocation7 + $0x148] sm:$0xff] %v646
    %711 = vst [vmem:[#allocation7 + $0x150] sm:$0xff] %v647
    %712 = vst [vmem:[#allocation7 + $0x158] sm:$0xff] %v648
    %713 = vst [vmem:[#allocation7 + $0x160] sm:$0xff] %v649
    %714 = vst [vmem:[#allocation7 + $0x168] sm:$0xff] %v650
    %715 = vst [vmem:[#allocation7 + $0x170] sm:$0xff] %v651
    %716 = vst [vmem:[#allocation7 + $0x178] sm:$0xff] %v652
    %717 = vst [vmem:[#allocation7 + $0x180] sm:$0xff] %v653
    %718 = vst [vmem:[#allocation7 + $0x188] sm:$0xff] %v654
    %719 = vst [vmem:[#allocation7 + $0x190] sm:$0xff] %v655
    %720 = vst [vmem:[#allocation7 + $0x198] sm:$0xff] %v656
    %721 = vst [vmem:[#allocation7 + $0x1a0] sm:$0xff] %v657
    %722 = vst [vmem:[#allocation7 + $0x1a8] sm:$0xff] %v658
    %723 = vst [vmem:[#allocation7 + $0x1b0] sm:$0xff] %v659
    %724 = vst [vmem:[#allocation7 + $0x1b8] sm:$0xff] %v660
    %725 = vst [vmem:[#allocation7 + $0x1c0] sm:$0xff] %v661
    %726 = vst [vmem:[#allocation7 + $0x1c8] sm:$0xff] %v662
    %727 = vst [vmem:[#allocation7 + $0x1d0] sm:$0xff] %v663
    %728 = vst [vmem:[#allocation7 + $0x1d8] sm:$0xff] %v664
    %729 = vst [vmem:[#allocation7 + $0x1e0] sm:$0xff] %v665
    %730 = vst [vmem:[#allocation7 + $0x1e8] sm:$0xff] %v666
    %731 = vst [vmem:[#allocation7 + $0x1f0] sm:$0xff] %v667
    %732 = vst [vmem:[#allocation7 + $0x1f8] sm:$0xff] %v668
    // Predicated region
    $region26: #{tpu_custom_call.1} parent=1 // pred_check
      _
    $region27: #{tpu_custom_call.1} parent=1 // pred_check_branch
      %734 = sbr.rel (0) target = $region29
    $region28: #{tpu_custom_call.1} parent=1 // pred_region
      %s736 = ssub.s32 8192, 8192
      %737 = vsyncadd [#allocation4], %s736
      %s738 = sshll.u32 [#allocation7], 4
      %s739 = int_to_ptr.vmem [resolvable:$true] %s738
      %744 = dma.vmem_to_hbm [thread:$0]  %s739, 8192, %s3, [#allocation4], 256, 256, 16
    $region29: #{tpu_custom_call.1} parent=1 // pred_fallthru
      _
    // Predicated region
    $region30: #{tpu_custom_call.1} parent=1 // pred_check
      _
    $region31: #{tpu_custom_call.1} parent=1 // pred_check_branch
      %746 = sbr.rel (0) target = $region33
    $region32: #{tpu_custom_call.1} parent=1 // pred_region
      %747 = dma.done [#allocation4], 8192
    $region33: #{tpu_custom_call.1} parent=1 // pred_fallthru
      _
    %748 = vsyncpa [#allocation3], 1
    %749 = vsyncpa [#allocation6], 1
    %750 = vsyncpa [#allocation4], 1

</llo_original>
